<compile_context>
chip_gen: v7x
topology: tpu7x:2x2x1
jax: 0.10.0
libtpu: 0.0.40
codegen_flags: <defaults>
</compile_context>

<pallas_src>
import math

import jax
import jax.numpy as jnp
from jax.experimental import pallas as pl
from jax.experimental.pallas import tpu as pltpu

EPS = 1e-8        # default eps buffer value of MeanPoissonLoss
_LANES = 128
_SUBLANES = 8


def _round_up(x: int, m: int) -> int:
    return ((x + m - 1) // m) * m


def _make_kernel(num_rows: int, block_m: int, c: int, k_steps: int,
                 needs_mask: bool):
    """Build the streaming-reduction kernel body (sizes baked in statically)."""
    groups = block_m // _SUBLANES

    def kernel(yt_ref, yp_ref, out_ref, acc_ref):
        p = pl.program_id(0)          # TensorCore shard ("parallel")
        k = pl.program_id(1)          # reduction step  ("arbitrary")

        @pl.when(k == 0)
        def _init():
            acc_ref[...] = jnp.zeros_like(acc_ref)

        yt = yt_ref[...].astype(jnp.float32) + EPS
        yp = yp_ref[...].astype(jnp.float32) + EPS
        term = yp - yt * jnp.log(yp)                    # VPU + EUP only

        if needs_mask:
            # Zero the ragged row tail (and any fully-overflowing grid step
            # whose index_map was clamped onto the last real block).
            # `needs_mask` is a static Python flag, compiled out when the rows
            # divide evenly.
            start = (p * k_steps + k) * block_m
            row = jax.lax.broadcasted_iota(jnp.int32, (block_m, 1), 0)
            term = jnp.where(start + row < num_rows, term, 0.0)

        # Fold (block_m, C) -> (8, C) with cheap VPU vreg adds; the expensive
        # XLU cross-lane reduce stays out of the hot loop (done in the wrapper).
        acc_ref[...] += jnp.sum(term.reshape(groups, _SUBLANES, c), axis=0)

        @pl.when(k == k_steps - 1)
        def _finalize():
            out_ref[...] = acc_ref[...]

    return kernel


def mean_poisson_loss(y_true, y_pred, *, ds_size, batch_size, ds_scale=True,
                      block_rows: int | None = None,
                      block_bytes: int = 4 * 1024 * 1024):
    """JAX/Pallas equivalent of MeanPoissonLoss.forward.

    y_true, y_pred : (B, N, T) responses / predicted rates
    ds_size        : len(ds[mouse_id].dataset)  (the BufferDict entry)
    batch_size     : the `batch_size` argument of forward()
    ds_scale       : args.ds_scale
    block_rows     : rows streamed per grid step (None -> auto ~block_bytes)
    block_bytes    : target per-input block size when block_rows is None
    """
    assert y_true.shape == y_pred.shape
    B = y_true.shape[0]
    total = int(y_true.size)

    # ---- 2-D view of the inputs (always a free, contiguous reshape) ---------
    if total % _LANES == 0:
        C = _LANES                       # perfectly lane-dense slab
        R = total // _LANES
    else:
        C = int(y_true.shape[-1])        # keep last dim as the lane dim
        R = total // C
    yt2d = y_true.reshape(R, C)
    yp2d = y_pred.reshape(R, C)

    # ---- tiling: ~block_bytes per input block, rows multiple of 8 -----------
    c_pad = _round_up(C, _LANES)
    itemsize = max(jnp.dtype(y_true.dtype).itemsize,
                   jnp.dtype(y_pred.dtype).itemsize)
    if block_rows is None:
        block_rows = max(_SUBLANES, block_bytes // (itemsize * c_pad))
    block_m = max(_SUBLANES, (block_rows // _SUBLANES) * _SUBLANES)
    block_m = min(block_m, _round_up(R, _SUBLANES))

    num_blocks = pl.cdiv(R, block_m)
    # 2-way split across TensorCores (up to ~2x on v7x; harmless on 1-TC chips).
    num_parts = 2 if num_blocks >= 2 else 1
    k_steps = pl.cdiv(num_blocks, num_parts)
    needs_mask = (num_parts * k_steps * block_m) != R

    last_block = num_blocks - 1
    if num_parts * k_steps == num_blocks:
        def in_idx(p, k):
            return (p * k_steps + k, 0)
    else:
        # Overflow steps of the core split re-read the last real block; the
        # in-kernel row mask zeroes their contribution.
        def in_idx(p, k):
            return (jnp.minimum(p * k_steps + k, last_block), 0)

    kernel = _make_kernel(R, block_m, C, k_steps, needs_mask)

    grid_spec = pltpu.PrefetchScalarGridSpec(
        num_scalar_prefetch=0,
        grid=(num_parts, k_steps),
        in_specs=[
            pl.BlockSpec((block_m, C), in_idx),
            pl.BlockSpec((block_m, C), in_idx),
        ],
        # One (8, C) partial-sum slab per TensorCore shard.
        out_specs=pl.BlockSpec((None, _SUBLANES, C), lambda p, k: (p, 0, 0)),
        scratch_shapes=[pltpu.VMEM((_SUBLANES, C), jnp.float32)],
    )

    # Pipeline VMEM: 2 inputs x 2 buffers x block bytes (+ tiny scratch/out).
    in_bytes = 2 * 2 * block_m * c_pad * itemsize
    vmem_limit = int(max(32 * 1024 * 1024, in_bytes + 4 * 1024 * 1024))

    partials = pl.pallas_call(
        kernel,
        out_shape=jax.ShapeDtypeStruct((num_parts, _SUBLANES, C), jnp.float32),
        grid_spec=grid_spec,
        compiler_params=pltpu.CompilerParams(
            dimension_semantics=("parallel", "arbitrary"),
            vmem_limit_bytes=vmem_limit,
        ),
    )(yt2d, yp2d)

    # Epilogue in XLA: one small cross-lane reduce + mean over batch + scaling.
    loss = jnp.sum(partials) / jnp.float32(B)
    scale = B / batch_size
    if ds_scale:
        scale = scale * math.sqrt(ds_size / batch_size)
    return loss * jnp.float32(scale)


def _reference_loss(y_true, y_pred, *, ds_size, batch_size, ds_scale=True):
    """Pure-JAX port of the PyTorch forward, for correctness checking."""
    yt = y_true.astype(jnp.float32) + EPS
    yp = y_pred.astype(jnp.float32) + EPS
    loss = jnp.mean(jnp.sum(yp - yt * jnp.log(yp), axis=(1, 2)))
    if ds_scale:
        loss = loss * jnp.sqrt(jnp.float32(ds_size) / batch_size)
    loss = loss * (y_true.shape[0] / batch_size)
    return loss


if __name__ == "__main__":
    key = jax.random.PRNGKey(0)
    k1, k2, k3, k4 = jax.random.split(key, 4)

    # Case 1: lane-dense layout (total % 128 == 0), single block, no mask.
    B, N, T = 2, 16, 128
    y_true = jax.random.uniform(k1, (B, N, T), dtype=jnp.float32,
                                minval=0.0, maxval=4.0)
    y_pred = jax.random.uniform(k2, (B, N, T), dtype=jnp.float32,
                                minval=0.05, maxval=4.0)
    ds_size, batch_size = 100, B

    loss = mean_poisson_loss(y_true, y_pred, ds_size=ds_size,
                             batch_size=batch_size, ds_scale=True)
    loss = jax.block_until_ready(loss)
    ref = _reference_loss(y_true, y_pred, ds_size=ds_size,
                          batch_size=batch_size, ds_scale=True)
    assert jnp.allclose(loss, ref, rtol=1e-5, atol=1e-5), (loss, ref)

    # Case 2: same data, tiny blocks -> multi-block grid, 2-way "parallel"
    # core split, persistent accumulator chain (evenly divisible: no mask).
    loss_mb = mean_poisson_loss(y_true, y_pred, ds_size=ds_size,
                                batch_size=batch_size, ds_scale=True,
                                block_rows=8)
    loss_mb = jax.block_until_ready(loss_mb)
    assert jnp.allclose(loss_mb, ref, rtol=1e-5, atol=1e-5), (loss_mb, ref)

    # Case 3: ragged shape (total % 128 != 0) -> last-dim lane layout, ragged
    # row tail mask, clamped index_map for the overflow step of the core split.
    B2, N2, T2 = 3, 7, 50
    yt2 = jax.random.uniform(k3, (B2, N2, T2), dtype=jnp.float32,
                             minval=0.0, maxval=4.0)
    yp2 = jax.random.uniform(k4, (B2, N2, T2), dtype=jnp.float32,
                             minval=0.05, maxval=4.0)
    loss2 = mean_poisson_loss(yt2, yp2, ds_size=57, batch_size=B2,
                              ds_scale=True, block_rows=8)
    loss2 = jax.block_until_ready(loss2)
    ref2 = _reference_loss(yt2, yp2, ds_size=57, batch_size=B2, ds_scale=True)
    assert jnp.allclose(loss2, ref2, rtol=1e-5, atol=1e-5), (loss2, ref2)

    print("KERNEL_OK")
</pallas_src>

<mosaic_0001>
module attributes {stable_mosaic.version = 11 : i64} {
  func.func @kernel(%arg0: i32, %arg1: i32, %arg2: memref<32x128xf32, #tpu.memory_space<vmem>>, %arg3: memref<32x128xf32, #tpu.memory_space<vmem>>, %arg4: memref<1x8x128xf32, #tpu.memory_space<vmem>>, %arg5: memref<8x128xf32, #tpu.memory_space<vmem>>) attributes {dimension_semantics = [#tpu.dimension_semantics<parallel>, #tpu.dimension_semantics<arbitrary>], iteration_bounds = array<i64: 1, 1>, scalar_prefetch = 0 : i64, scratch_operands = 1 : i64, tpu.core_type = #tpu.core_type<tc>, window_params = [{transform_indices = @transform_0, window_bounds = array<i64: 32, 128>}, {transform_indices = @transform_1, window_bounds = array<i64: 32, 128>}, {transform_indices = @transform_2, window_bounds = array<i64: 1, 8, 128>}]} {
    %c0_i32 = arith.constant 0 : i32
    %0 = arith.cmpi eq, %arg1, %c0_i32 : i32
    %1 = arith.extui %0 : i1 to i32
    %c0_i32_0 = arith.constant 0 : i32
    %2 = arith.cmpi ne, %1, %c0_i32_0 : i32
    scf.if %2 {
      %cst_12 = arith.constant 0.000000e+00 : f32
      %20 = vector.broadcast %cst_12 : f32 to vector<8x128xf32>
      %c0_13 = arith.constant 0 : index
      %c0_14 = arith.constant 0 : index
      %21 = vector.load %arg5[%c0_13, %c0_14] : memref<8x128xf32, #tpu.memory_space<vmem>>, vector<8x128xf32>
      tpu.vector_store %arg5[%c0_13, %c0_14], %20 {strides = array<i32>} : memref<8x128xf32, #tpu.memory_space<vmem>>, vector<8x128xf32>,
    } else {
    }
    %c0 = arith.constant 0 : index
    %c0_1 = arith.constant 0 : index
    %3 = vector.load %arg2[%c0, %c0_1] : memref<32x128xf32, #tpu.memory_space<vmem>>, vector<32x128xf32>
    %cst = arith.constant 9.99999993E-9 : f32
    %4 = vector.broadcast %cst : f32 to vector<32x128xf32>
    %5 = arith.addf %3, %4 : vector<32x128xf32>
    %c0_2 = arith.constant 0 : index
    %c0_3 = arith.constant 0 : index
    %6 = vector.load %arg3[%c0_2, %c0_3] : memref<32x128xf32, #tpu.memory_space<vmem>>, vector<32x128xf32>
    %cst_4 = arith.constant 9.99999993E-9 : f32
    %7 = vector.broadcast %cst_4 : f32 to vector<32x128xf32>
    %8 = arith.addf %6, %7 : vector<32x128xf32>
    %9 = math.log %8 : vector<32x128xf32>
    %10 = arith.mulf %5, %9 : vector<32x128xf32>
    %11 = arith.subf %8, %10 : vector<32x128xf32>
    %c0_5 = arith.constant 0 : index
    %c0_6 = arith.constant 0 : index
    %12 = vector.load %arg5[%c0_5, %c0_6] : memref<8x128xf32, #tpu.memory_space<vmem>>, vector<8x128xf32>
    %13 = vector.shape_cast %11 : vector<32x128xf32> to vector<4x8x128xf32>
    %cst_7 = arith.constant dense<0.000000e+00> : vector<8x128xf32>
    %14 = vector.multi_reduction <add>, %13, %cst_7 [0] : vector<4x8x128xf32> to vector<8x128xf32>
    %15 = arith.addf %12, %14 : vector<8x128xf32>
    %c0_8 = arith.constant 0 : index
    %c0_9 = arith.constant 0 : index
    %16 = vector.load %arg5[%c0_8, %c0_9] : memref<8x128xf32, #tpu.memory_space<vmem>>, vector<8x128xf32>
    tpu.vector_store %arg5[%c0_8, %c0_9], %15 {strides = array<i32>} : memref<8x128xf32, #tpu.memory_space<vmem>>, vector<8x128xf32>,
    %c0_i32_10 = arith.constant 0 : i32
    %17 = arith.cmpi eq, %arg1, %c0_i32_10 : i32
    %18 = arith.extui %17 : i1 to i32
    %c0_i32_11 = arith.constant 0 : i32
    %19 = arith.cmpi ne, %18, %c0_i32_11 : i32
    scf.if %19 {
      %c0_12 = arith.constant 0 : index
      %c0_13 = arith.constant 0 : index
      %20 = vector.load %arg5[%c0_12, %c0_13] : memref<8x128xf32, #tpu.memory_space<vmem>>, vector<8x128xf32>
      %c0_14 = arith.constant 0 : index
      %c0_15 = arith.constant 0 : index
      %c0_16 = arith.constant 0 : index
      %21 = vector.load %arg4[%c0_14, %c0_15, %c0_16] : memref<1x8x128xf32, #tpu.memory_space<vmem>>, vector<1x8x128xf32>
      %22 = vector.shape_cast %21 : vector<1x8x128xf32> to vector<8x128xf32>
      %23 = vector.shape_cast %20 : vector<8x128xf32> to vector<1x8x128xf32>
      tpu.vector_store %arg4[%c0_14, %c0_15, %c0_16], %23 {strides = array<i32>} : memref<1x8x128xf32, #tpu.memory_space<vmem>>, vector<1x8x128xf32>,
    } else {
    }
    return
  }
  func.func @transform_0(%arg0: i32, %arg1: i32) -> (i32, i32) {
    %c1_i32 = arith.constant 1 : i32
    %0 = arith.muli %arg0, %c1_i32 : i32
    %1 = arith.addi %0, %arg1 : i32
    %c0_i32 = arith.constant 0 : i32
    %c0_i32_0 = arith.constant 0 : i32
    return %1, %c0_i32 : i32, i32
  }
  func.func @transform_1(%arg0: i32, %arg1: i32) -> (i32, i32) {
    %c1_i32 = arith.constant 1 : i32
    %0 = arith.muli %arg0, %c1_i32 : i32
    %1 = arith.addi %0, %arg1 : i32
    %c0_i32 = arith.constant 0 : i32
    %c0_i32_0 = arith.constant 0 : i32
    return %1, %c0_i32 : i32, i32
  }
  func.func @transform_2(%arg0: i32, %arg1: i32) -> (i32, i32, i32) {
    %c0_i32 = arith.constant 0 : i32
    %c0_i32_0 = arith.constant 0 : i32
    %c0_i32_1 = arith.constant 0 : i32
    return %arg0, %c0_i32, %c0_i32_0 : i32, i32, i32
  }
}

</mosaic_0001>

<llo_original>
// kernel: tpu_custom_call.1
$region0: #{tpu_custom_call.1}
  #allocation0 [shape = 'u32[]', space=smem, size = 0x4, offset = 0x4, fixed_abs, tag = 'smem constant byte address 0x4 - core index']
  #allocation1 [shape = 'u32[144,128]{1,0:T(1,128)}', space=vmem, size = 0x12000, scoped, tag = 'internal scratch']
  #allocation2 [shape = 'f32[8,128]{1,0:T(8,128)}', space=vmem, size = 0x1000, scoped, tag = 'scratch operand']
  %s0 = inlined_call_operand.hbm [shape: f32[32,128], index: 0, kind: input, shape index: {}]
  %s1 = inlined_call_operand.hbm [shape: f32[32,128], index: 1, kind: input, shape index: {}]
  %s2 = inlined_call_operand.hbm [shape: f32[1,8,128], index: 2, kind: output, shape index: {}]
  %s3 = sld [smem:[#allocation0]]
  $region34: #{tpu_custom_call.1} parent=0
    _
  %s5 = ssub.s32 1, %s3
  %s6 = scalar_select 0, %s5, %s3
  $region1: #{tpu_custom_call.1} parent=0
    #allocation3 [shape = 'u8[16384]{0}', space=vmem, size = 0x4000, scoped, tag = 'input window, operand 0, single buffered']
    #allocation4 [shape = 's32[1]{0}', space=sflag, size = 0x4, scoped, tag = 'scoped memory for tpu_custom_call.1']
    #allocation5 [shape = 's32[1]{0}', space=sflag, size = 0x4, scoped, tag = 'scoped memory for tpu_custom_call.1']
    #allocation6 [shape = 'u8[16384]{0}', space=vmem, size = 0x4000, scoped, tag = 'input window, operand 1, single buffered']
    #allocation7 [shape = 's32[1]{0}', space=sflag, size = 0x4, scoped, tag = 'scoped memory for tpu_custom_call.1']
    #allocation8 [shape = 'u8[4096]{0}', space=vmem, size = 0x1000, scoped, tag = 'output window, operand 0, single buffered']
    %7 = vsyncpa [#allocation4], 0
    %8 = vsyncpa [#allocation7], 0
    %9 = vsyncpa [#allocation5], 0
    // Predicated region
    $region2: #{tpu_custom_call.1} parent=1 // pred_check
      _
    $region3: #{tpu_custom_call.1} parent=1 // pred_check_branch
      %11 = sbr.rel (0) target = $region5
    $region4: #{tpu_custom_call.1} parent=1 // pred_region
      %s12 = sadd.s32 0, 0
      %s13 = smul.u32 4, %s12
      %s15 = ssub.s32 512, 512
      %16 = vsyncadd [#allocation4], %s15
      %s17 = smul.addr %s13, 128
      %s18 = scalar_lea.hbm %s0, %s17
      %s19 = sshll.u32 [#allocation3], 4
      %s20 = int_to_ptr.vmem [resolvable:$true] %s19
      %25 = dma.hbm_to_vmem [thread:$0]  %s18, 512, %s20, [#allocation4], 128, 128, 8
    $region5: #{tpu_custom_call.1} parent=1 // pred_fallthru
      _
    // Predicated region
    $region6: #{tpu_custom_call.1} parent=1 // pred_check
      _
    $region7: #{tpu_custom_call.1} parent=1 // pred_check_branch
      %27 = sbr.rel (0) target = $region9
    $region8: #{tpu_custom_call.1} parent=1 // pred_region
      %s28 = sadd.s32 0, 0
      %s29 = smul.u32 4, %s28
      %s31 = ssub.s32 512, 512
      %32 = vsyncadd [#allocation7], %s31
      %s33 = smul.addr %s29, 128
      %s34 = scalar_lea.hbm %s1, %s33
      %s35 = sshll.u32 [#allocation6], 4
      %s36 = int_to_ptr.vmem [resolvable:$true] %s35
      %41 = dma.hbm_to_vmem [thread:$0]  %s34, 512, %s36, [#allocation7], 128, 128, 8
    $region9: #{tpu_custom_call.1} parent=1 // pred_fallthru
      _
    // Predicated region
    $region10: #{tpu_custom_call.1} parent=1 // pred_check
      _
    $region11: #{tpu_custom_call.1} parent=1 // pred_check_branch
      %43 = sbr.rel (0) target = $region13
    $region12: #{tpu_custom_call.1} parent=1 // pred_region
      %44 = dma.done [#allocation4], 512
    $region13: #{tpu_custom_call.1} parent=1 // pred_fallthru
      _
    // Predicated region
    $region14: #{tpu_custom_call.1} parent=1 // pred_check
      _
    $region15: #{tpu_custom_call.1} parent=1 // pred_check_branch
      %46 = sbr.rel (0) target = $region17
    $region16: #{tpu_custom_call.1} parent=1 // pred_region
      %47 = dma.done [#allocation7], 512
    $region17: #{tpu_custom_call.1} parent=1 // pred_fallthru
      _
    %s48 = sadd.s32 0, 0
    %s49 = smul.u32 4, %s48
    %s50 = sadd.s32 0, 0
    %s51 = smul.u32 4, %s50
    %p52 = scmp.eq.s32.totalorder 0, 0
    // Predicated region
    $region18: #{tpu_custom_call.1} parent=1 // pred_check
      %p53 = pneg %p52
    $region19: #{tpu_custom_call.1} parent=1 // pred_check_branch
      %55 = sbr.rel (%p53) target = $region21
    $region20: #{tpu_custom_call.1} parent=1 // pred_region
      %56 = vst [vmem:[#allocation2] sm:$0xff] 0.0
    $region21: #{tpu_custom_call.1} parent=1 // pred_fallthru
      _
    %v57 = vld [vmem:[#allocation3] sm:$0xff]
    %v58 = vld [vmem:[#allocation3 + $0x8] sm:$0xff]
    %v59 = vld [vmem:[#allocation3 + $0x10] sm:$0xff]
    %v60 = vld [vmem:[#allocation3 + $0x18] sm:$0xff]
    %v61 = vadd.f32 %v57, 1e-08
    %v62 = vadd.f32 %v58, 1e-08
    %v63 = vadd.f32 %v59, 1e-08
    %v64 = vadd.f32 %v60, 1e-08
    %v65 = vld [vmem:[#allocation6] sm:$0xff]
    %v66 = vld [vmem:[#allocation6 + $0x8] sm:$0xff]
    %v67 = vld [vmem:[#allocation6 + $0x10] sm:$0xff]
    %v68 = vld [vmem:[#allocation6 + $0x18] sm:$0xff]
    %v69 = vadd.f32 %v65, 1e-08
    %v70 = vadd.f32 %v66, 1e-08
    %v71 = vadd.f32 %v67, 1e-08
    %v72 = vadd.f32 %v68, 1e-08
    %v73 = vlog2.pop %v69
    %v74 = vmul.f32 %v73, 0.6931472
    %v75 = vlog2.pop %v70
    %v76 = vmul.f32 %v75, 0.6931472
    %v77 = vlog2.pop %v71
    %v78 = vmul.f32 %v77, 0.6931472
    %v79 = vlog2.pop %v72
    %v80 = vmul.f32 %v79, 0.6931472
    %v81 = vmul.f32 %v61, %v74
    %v82 = vmul.f32 %v62, %v76
    %v83 = vmul.f32 %v63, %v78
    %v84 = vmul.f32 %v64, %v80
    %v85 = vsub.f32 %v69, %v81
    %v86 = vsub.f32 %v70, %v82
    %v87 = vsub.f32 %v71, %v83
    %v88 = vsub.f32 %v72, %v84
    %v89 = vld [vmem:[#allocation2] sm:$0xff]
    %v90 = vadd.f32 %v85, %v86
    %v91 = vadd.f32 %v90, %v87
    %v92 = vadd.f32 %v91, %v88
    %v93 = vadd.f32 %v89, %v92
    %94 = vst [vmem:[#allocation2] sm:$0xff] %v93
    // Predicated region
    $region22: #{tpu_custom_call.1} parent=1 // pred_check
      %p95 = pneg %p52
    $region23: #{tpu_custom_call.1} parent=1 // pred_check_branch
      %97 = sbr.rel (%p95) target = $region25
    $region24: #{tpu_custom_call.1} parent=1 // pred_region
      %v98 = vld [vmem:[#allocation2] sm:$0xff]
      %99 = vst [vmem:[#allocation8] sm:$0xff] %v98
    $region25: #{tpu_custom_call.1} parent=1 // pred_fallthru
      _
    // Predicated region
    $region26: #{tpu_custom_call.1} parent=1 // pred_check
      _
    $region27: #{tpu_custom_call.1} parent=1 // pred_check_branch
      %101 = sbr.rel (0) target = $region29
    $region28: #{tpu_custom_call.1} parent=1 // pred_region
      %s103 = ssub.s32 128, 128
      %104 = vsyncadd [#allocation5], %s103
      %s106 = sshll.u32 [#allocation8], 4
      %s107 = int_to_ptr.vmem [resolvable:$true] %s106
      %109 = dma.vmem_to_hbm [thread:$0]  %s107, 128, %s2, [#allocation5]
    $region29: #{tpu_custom_call.1} parent=1 // pred_fallthru
      _
    // Predicated region
    $region30: #{tpu_custom_call.1} parent=1 // pred_check
      _
    $region31: #{tpu_custom_call.1} parent=1 // pred_check_branch
      %111 = sbr.rel (0) target = $region33
    $region32: #{tpu_custom_call.1} parent=1 // pred_region
      %112 = dma.done [#allocation5], 128
    $region33: #{tpu_custom_call.1} parent=1 // pred_fallthru
      _
    %113 = vsyncpa [#allocation4], 1
    %114 = vsyncpa [#allocation7], 1
    %115 = vsyncpa [#allocation5], 1

</llo_original>
